<compile_context>
chip_gen: v6e
topology: v6e:2x2x1
jax: 0.10.0
libtpu: 0.0.40
codegen_flags: <defaults>
</compile_context>

<pallas_src>
import jax
import jax.numpy as jnp
from jax.experimental import pallas as pl
from jax.experimental.pallas import tpu as pltpu


# ---------------------------------------------------------------- kernels ---

def _normalize_kernel_rowparams(img_ref, ss_ref, out_ref):
    # img/out: (bm, bn); ss: (bm, 2) f32 with [:, 0] = scale, [:, 1] = shift.
    x = img_ref[...].astype(jnp.float32)
    scale = ss_ref[:, 0:1]
    shift = ss_ref[:, 1:2]
    out_ref[...] = (x * scale + shift).astype(out_ref.dtype)


def _normalize_kernel_colparams(img_ref, ss_ref, out_ref):
    # img/out: (bm, bn); ss: (2, bn) f32 with [0] = scale, [1] = shift.
    x = img_ref[...].astype(jnp.float32)
    scale = ss_ref[0:1, :]
    shift = ss_ref[1:2, :]
    out_ref[...] = (x * scale + shift).astype(out_ref.dtype)


# ---------------------------------------------------------------- helpers ---

def _cdiv(a, b):
    return -(-a // b)


def _round_up(a, m):
    return _cdiv(a, m) * m


def _sublane_align(dtype):
    # Packed-sublane tile requirement: 8 for 32-bit, 16 for 16-bit, 32 for 8-bit.
    return {4: 8, 2: 16, 1: 32}.get(jnp.dtype(dtype).itemsize, 8)


def _pick_block(dim, align, max_elems):
    """Largest multiple of `align` that is <= min(dim, max_elems); full dim if tiny."""
    if dim <= align:
        return dim  # full extent (always a legal block dim)
    cap = max(align, min(dim, max_elems))
    return (cap // align) * align


def _target_tile_bytes():
    # Generation-aware per-operand tile target. Physical VMEM is the reliable
    # trace-time discriminator: v7x has 64 MiB/TC (and ~3.2 TB/s HBM, so the
    # ~0.35 us/step overhead is a bigger fraction -> larger tiles); v5e/v6e
    # have 128 MiB.
    try:
        vmem = int(pltpu.get_tpu_info().vmem_capacity_bytes)
    except Exception:
        vmem = 64 << 20
    return (6 << 20) if vmem <= (64 << 20) else (4 << 20)


_MIN_SPLIT_TILE_BYTES = 512 * 1024


def _ensure_min_steps(rows, cols, bm, bn, itemsize, row_align, min_steps=4):
    """Shrink blocks (rows first, then lanes) until the grid has >= min_steps
    steps, but never below ~512 KiB per tile (tiny inputs stay single-step)."""
    while _cdiv(rows, bm) * _cdiv(cols, bn) < min_steps:
        if bm * bn * itemsize < 2 * _MIN_SPLIT_TILE_BYTES:
            break
        if bm > row_align:
            bm = max(row_align, _round_up(_cdiv(bm, 2), row_align))
        elif bn > 128:
            bn = max(128, _round_up(_cdiv(bn, 2), 128))
        else:
            break
    return bm, bn


# ---------------------------------------------------------------- wrapper ---

def normalize(img, mean, std):
    """(img - mean[:, None, None]) / std[:, None, None] over NCHW input."""
    N, C, H, W = img.shape
    mean32 = jnp.asarray(mean, jnp.float32).reshape(-1)
    std32 = jnp.asarray(std, jnp.float32).reshape(-1)
    scale_c = 1.0 / std32          # out = img * scale + shift  (no VPU divide)
    shift_c = -mean32 * scale_c

    itemsize = jnp.dtype(img.dtype).itemsize
    row_align = _sublane_align(img.dtype)
    hw = H * W

    # Layout selection: prefer lane-dense H*W with per-row params; fall back
    # to merging C into the lane dim when H*W is small or not 128-aligned so
    # output stores stay full-width.
    if hw % 128 == 0:
        rows, cols = N * C, hw
        ss = jnp.stack([jnp.tile(scale_c, N), jnp.tile(shift_c, N)], axis=1)   # (rows, 2)
        kernel = _normalize_kernel_rowparams
        params_per_row = True
    else:
        rows, cols = N, C * hw
        ss = jnp.stack([jnp.repeat(scale_c, hw), jnp.repeat(shift_c, hw)], axis=0)  # (2, cols)
        kernel = _normalize_kernel_colparams
        params_per_row = False

    x2 = img.reshape(rows, cols)

    # Tile selection: lane (last) dim first, then rows to fill the byte target.
    target = _target_tile_bytes()
    max_elems = max(128 * row_align, target // itemsize)
    bn = _pick_block(cols, 128, max_elems)
    bm_cap = max(row_align, max_elems // max(bn, 1))
    if params_per_row:
        # (bm, 2) params are lane-padded to (bm, 128) in VMEM; cap bm so that
        # padding never rivals the data tiles when cols is small.
        bm_cap = min(bm_cap, 2048)
    bm = _pick_block(rows, row_align, bm_cap)
    bm, bn = _ensure_min_steps(rows, cols, bm, bn, itemsize, row_align)
    grid = (_cdiv(rows, bm), _cdiv(cols, bn))

    if params_per_row:
        ss_spec = pl.BlockSpec((bm, 2), lambda i, j: (i, 0))
        ss_pad_bytes = _round_up(bm, 8) * 128 * 4     # lane-padded per buffer
    else:
        ss_spec = pl.BlockSpec((2, bn), lambda i, j: (0, j))
        ss_pad_bytes = 8 * bn * 4                     # sublane-padded per buffer

    # Explicit VMEM budget: double-buffered img-in + img-out + padded params,
    # plus headroom. Raised above v5e's 16 MiB default, capped well inside
    # v7x's 64 MiB physical per-TC VMEM.
    tile_bytes = bm * bn * itemsize
    need = 4 * tile_bytes + 2 * ss_pad_bytes + (4 << 20)
    vmem_limit = int(min(48 << 20, max(32 << 20, need)))

    cost = pl.CostEstimate(
        flops=2 * rows * cols,
        transcendentals=0,
        bytes_accessed=2 * rows * cols * itemsize + int(ss.size) * 4,
    )

    out2 = pl.pallas_call(
        kernel,
        out_shape=jax.ShapeDtypeStruct((rows, cols), img.dtype),
        grid=grid,
        in_specs=[
            pl.BlockSpec((bm, bn), lambda i, j: (i, j)),
            ss_spec,
        ],
        out_specs=pl.BlockSpec((bm, bn), lambda i, j: (i, j)),
        compiler_params=pltpu.CompilerParams(
            dimension_semantics=("parallel", "parallel"),
            vmem_limit_bytes=vmem_limit,
        ),
        cost_estimate=cost,
    )(x2, ss)

    return out2.reshape(N, C, H, W)


if __name__ == "__main__":
    key = jax.random.PRNGKey(0)
    # RGB-style normalization: 3 channels to match the 3-entry mean/std.
    N, C, H, W = 2, 3, 16, 16

    img = jax.random.uniform(key, (N, C, H, W), dtype=jnp.float32)
    mean = jnp.array([0.485, 0.456, 0.406], dtype=jnp.float32)
    std = jnp.array([0.229, 0.224, 0.225], dtype=jnp.float32)

    out = jax.block_until_ready(normalize(img, mean, std))

    # Reference: exact broadcast-divide semantics of the PyTorch module.
    ref = (img - mean.reshape(-1, 1, 1)) / std.reshape(-1, 1, 1)
    assert out.shape == img.shape
    assert jnp.allclose(out, ref, atol=1e-5, rtol=1e-5), float(
        jnp.max(jnp.abs(out - ref))
    )

    print("KERNEL_OK")
</pallas_src>

<mosaic_0001>
module attributes {stable_mosaic.version = 11 : i64} {
  func.func @_normalize_kernel_rowparams(%arg0: i32, %arg1: i32, %arg2: memref<6x256xf32, #tpu.memory_space<vmem>>, %arg3: memref<6x2xf32, #tpu.memory_space<vmem>>, %arg4: memref<6x256xf32, #tpu.memory_space<vmem>>) attributes {dimension_semantics = [#tpu.dimension_semantics<parallel>, #tpu.dimension_semantics<parallel>], iteration_bounds = array<i64: 1, 1>, scalar_prefetch = 0 : i64, scratch_operands = 0 : i64, tpu.core_type = #tpu.core_type<tc>, window_params = [{transform_indices = @transform_0, window_bounds = array<i64: 6, 256>}, {transform_indices = @transform_1, window_bounds = array<i64: 6, 2>}, {transform_indices = @transform_2, window_bounds = array<i64: 6, 256>}]} {
    %c0 = arith.constant 0 : index
    %c0_0 = arith.constant 0 : index
    %0 = vector.load %arg2[%c0, %c0_0] : memref<6x256xf32, #tpu.memory_space<vmem>>, vector<6x256xf32>
    %c0_1 = arith.constant 0 : index
    %c0_2 = arith.constant 0 : index
    %1 = vector.load %arg3[%c0_1, %c0_2] : memref<6x2xf32, #tpu.memory_space<vmem>>, vector<6x1xf32>
    %c0_3 = arith.constant 0 : index
    %c1 = arith.constant 1 : index
    %2 = vector.load %arg3[%c0_3, %c1] : memref<6x2xf32, #tpu.memory_space<vmem>>, vector<6x1xf32>
    %3 = vector.broadcast %1 : vector<6x1xf32> to vector<6x256xf32>
    %4 = arith.mulf %0, %3 : vector<6x256xf32>
    %5 = vector.broadcast %2 : vector<6x1xf32> to vector<6x256xf32>
    %6 = arith.addf %4, %5 : vector<6x256xf32>
    %c0_4 = arith.constant 0 : index
    %c0_5 = arith.constant 0 : index
    %7 = vector.load %arg4[%c0_4, %c0_5] : memref<6x256xf32, #tpu.memory_space<vmem>>, vector<6x256xf32>
    tpu.vector_store %arg4[%c0_4, %c0_5], %6 {strides = array<i32>} : memref<6x256xf32, #tpu.memory_space<vmem>>, vector<6x256xf32>,
    return
  }
  func.func @transform_0(%arg0: i32, %arg1: i32) -> (i32, i32) {
    %c0_i32 = arith.constant 0 : i32
    return %arg0, %arg1 : i32, i32
  }
  func.func @transform_1(%arg0: i32, %arg1: i32) -> (i32, i32) {
    %c0_i32 = arith.constant 0 : i32
    %c0_i32_0 = arith.constant 0 : i32
    return %arg0, %c0_i32 : i32, i32
  }
  func.func @transform_2(%arg0: i32, %arg1: i32) -> (i32, i32) {
    %c0_i32 = arith.constant 0 : i32
    return %arg0, %arg1 : i32, i32
  }
}

</mosaic_0001>

<llo_original>
// kernel: tpu_custom_call.1
$region0: #{tpu_custom_call.1}
  #allocation0 [shape = 'u32[]', space=smem, size = 0x4, offset = 0x4, fixed_abs, tag = 'smem constant byte address 0x4 - core index']
  #allocation1 [shape = 'u32[144,128]{1,0:T(1,128)}', space=vmem, size = 0x12000, scoped, tag = 'internal scratch']
  %s0 = inlined_call_operand.hbm [shape: f32[6,256], index: 0, kind: input, shape index: {}]
  %s1 = inlined_call_operand.vmem [shape: f32[6,2], index: 1, kind: input, shape index: {}]
  %s2 = inlined_call_operand.hbm [shape: f32[6,256], index: 2, kind: output, shape index: {}]
  %s3 = sld [smem:[#allocation0]]
  $region22: #{tpu_custom_call.1} parent=0
    _
  %s5 = ssub.s32 1, %s3
  %s6 = scalar_select 0, %s5, %s3
  $region1: #{tpu_custom_call.1} parent=0
    #allocation2 [shape = 'u8[8192]{0}', space=vmem, size = 0x2000, scoped, tag = 'input window, operand 0, single buffered']
    #allocation3 [shape = 's32[1]{0}', space=sflag, size = 0x4, scoped, tag = 'scoped memory for tpu_custom_call.1']
    #allocation4 [shape = 's32[1]{0}', space=sflag, size = 0x4, scoped, tag = 'scoped memory for tpu_custom_call.1']
    #allocation5 [shape = 'u8[8192]{0}', space=vmem, size = 0x2000, scoped, tag = 'output window, operand 0, single buffered']
    %7 = vsyncpa [#allocation3], 0
    %8 = vsyncpa [#allocation4], 0
    // Predicated region
    $region2: #{tpu_custom_call.1} parent=1 // pred_check
      _
    $region3: #{tpu_custom_call.1} parent=1 // pred_check_branch
      %10 = sbr.rel (0) target = $region5
    $region4: #{tpu_custom_call.1} parent=1 // pred_region
      %s12 = ssub.s32 256, 256
      %13 = vsyncadd [#allocation3], %s12
      %s15 = sshll.u32 [#allocation2], 4
      %s16 = int_to_ptr.vmem [resolvable:$true] %s15
      %18 = dma.hbm_to_vmem [thread:$0]  %s0, 256, %s16, [#allocation3]
    $region5: #{tpu_custom_call.1} parent=1 // pred_fallthru
      _
    // Predicated region
    $region6: #{tpu_custom_call.1} parent=1 // pred_check
      _
    $region7: #{tpu_custom_call.1} parent=1 // pred_check_branch
      %20 = sbr.rel (0) target = $region9
    $region8: #{tpu_custom_call.1} parent=1 // pred_region
      _
    $region9: #{tpu_custom_call.1} parent=1 // pred_fallthru
      _
    // Predicated region
    $region10: #{tpu_custom_call.1} parent=1 // pred_check
      _
    $region11: #{tpu_custom_call.1} parent=1 // pred_check_branch
      %22 = sbr.rel (0) target = $region13
    $region12: #{tpu_custom_call.1} parent=1 // pred_region
      %23 = dma.done [#allocation3], 256
    $region13: #{tpu_custom_call.1} parent=1 // pred_fallthru
      _
    %v24 = vld [vmem:[#allocation2] sm:$0x3f]
    %v25 = vld [vmem:[#allocation2 + $0x8] sm:$0x3f]
    %v26 = vld [vmem:[%s1] sm:$0x3f]
    %28 = vset.pattern.permute.xlu0 0
    %29 = vperm.xlu0 %28, %v26
    %v30 = vpop.permute.xlu0 %29
    %v32 = vmul.f32 %v24, %v30
    %v33 = vmul.f32 %v25, %v30
    %34 = vset.pattern.permute.xlu0 1
    %35 = vperm.xlu0 %34, %v26
    %v36 = vpop.permute.xlu0 %35
    %v38 = vadd.f32 %v32, %v36
    %v39 = vadd.f32 %v33, %v36
    %40 = vst [vmem:[#allocation5] sm:$0x3f] %v38
    %41 = vst [vmem:[#allocation5 + $0x8] sm:$0x3f] %v39
    // Predicated region
    $region14: #{tpu_custom_call.1} parent=1 // pred_check
      _
    $region15: #{tpu_custom_call.1} parent=1 // pred_check_branch
      %43 = sbr.rel (0) target = $region17
    $region16: #{tpu_custom_call.1} parent=1 // pred_region
      %s45 = ssub.s32 256, 256
      %46 = vsyncadd [#allocation4], %s45
      %s48 = sshll.u32 [#allocation5], 4
      %s49 = int_to_ptr.vmem [resolvable:$true] %s48
      %51 = dma.vmem_to_hbm [thread:$0]  %s49, 256, %s2, [#allocation4]
    $region17: #{tpu_custom_call.1} parent=1 // pred_fallthru
      _
    // Predicated region
    $region18: #{tpu_custom_call.1} parent=1 // pred_check
      _
    $region19: #{tpu_custom_call.1} parent=1 // pred_check_branch
      %53 = sbr.rel (0) target = $region21
    $region20: #{tpu_custom_call.1} parent=1 // pred_region
      %54 = dma.done [#allocation4], 256
    $region21: #{tpu_custom_call.1} parent=1 // pred_fallthru
      _
    %55 = vsyncpa [#allocation3], 1
    %56 = vsyncpa [#allocation4], 1

</llo_original>
